<compile_context>
chip_gen: v5e
topology: v5e:2x2
jax: 0.10.0
libtpu: 0.0.40
codegen_flags: <defaults>
</compile_context>

<pallas_src>
import functools

import jax
import jax.numpy as jnp
from jax.experimental import pallas as pl
from jax.experimental.pallas import tpu as pltpu


# Logical layer dims (PyTorch spec): 784 -> 150 -> 100 -> 50 -> 10
IN_DIM = 784
H1, H2, H3, OUT = 150, 100, 50, 10
# Lane-dense padded dims (multiples of 128)
H1_P, H2_P, H3_P, OUT_P = 256, 128, 128, 128


def _round_up(x, m):
    return (x + m - 1) // m * m


def _sigmoid_bf16(z_f32):
    """sigmoid(z) = 0.5 * tanh(0.5 * z) + 0.5 -- one EUP transcendental.
    Computed in f32 (safe on v5e: no bf16 EUP), single cast to bf16 for the
    next MXU dot."""
    return (jnp.tanh(z_f32 * 0.5) * 0.5 + 0.5).astype(jnp.bfloat16)


def make_mlp_kernel(chunks):
    def mlp_kernel(x_ref,
                   w1_ref, b1_ref,
                   w2_ref, b2_ref,
                   w3_ref, b3_ref,
                   w4_ref, b4_ref,
                   o_ref):
        # One (TB, 784) bf16 activation tile per grid step; weights/biases are
        # VMEM-resident (constant index_map). The tile is split into `chunks`
        # independent row-chunks so the scheduler can overlap chunk k's MXU
        # work with chunk k-1's EUP (sigmoid) work.
        tb = x_ref.shape[0]
        rows = tb // chunks
        for c in range(chunks):
            sl = slice(c * rows, (c + 1) * rows)  # static, sublane-aligned
            h = x_ref[sl, :]                      # bf16

            z = jnp.dot(h, w1_ref[...], preferred_element_type=jnp.float32)
            h = _sigmoid_bf16(z + b1_ref[...])

            z = jnp.dot(h, w2_ref[...], preferred_element_type=jnp.float32)
            h = _sigmoid_bf16(z + b2_ref[...])

            z = jnp.dot(h, w3_ref[...], preferred_element_type=jnp.float32)
            h = _sigmoid_bf16(z + b3_ref[...])

            z = jnp.dot(h, w4_ref[...], preferred_element_type=jnp.float32)
            h = _sigmoid_bf16(z + b4_ref[...])

            o_ref[sl, :] = h                      # bf16, lane-dense store
    return mlp_kernel


def prepare_params(params):
    """PyTorch-layout f32 params ((W[out,in], b[out]) x 4) ->
    transposed, zero-padded, bf16 weights + f32 (1, out_p) biases."""
    (w1, b1), (w2, b2), (w3, b3), (w4, b4) = params

    def prep(w, b, in_p, out_p):
        wt = w.T  # (in, out)
        wt = jnp.pad(wt, ((0, in_p - wt.shape[0]), (0, out_p - wt.shape[1])))
        bp = jnp.pad(b, (0, out_p - b.shape[0])).reshape(1, out_p)
        return wt.astype(jnp.bfloat16), bp.astype(jnp.float32)

    return (prep(w1, b1, IN_DIM, H1_P),
            prep(w2, b2, H1_P, H2_P),
            prep(w3, b3, H2_P, H3_P),
            prep(w4, b4, H3_P, OUT_P))


def _choose_tb(B, block_batch, align=16, min_steps=2):
    """Pick a batch tile: bf16-sublane aligned (16), minimal padding waste,
    >= min_steps grid steps when B is big enough (v7x megacore), capped by
    block_batch to amortize per-step pipeline overhead."""
    if B <= align * min_steps:
        return _round_up(B, align)
    n_steps = max(min_steps, pl.cdiv(B, block_batch))
    return _round_up(pl.cdiv(B, n_steps), align)


def mlp_forward(x, params, block_batch=1024):
    """x: (B, 1, 28, 28) or (B, 784) float.  Returns (B, 10) float32."""
    # bf16 input: halves the dominant HBM stream into the kernel.
    x2d = x.reshape(-1, IN_DIM).astype(jnp.bfloat16)
    B = x2d.shape[0]

    prepared = prepare_params(params)
    (w1, b1), (w2, b2), (w3, b3), (w4, b4) = prepared

    TB = _choose_tb(B, block_batch)
    B_pad = _round_up(B, TB)
    if B_pad != B:
        x2d = jnp.pad(x2d, ((0, B_pad - B), (0, 0)))

    chunks = 2 if TB >= 32 else 1  # TB multiple of 16 -> chunk rows multiple of 8

    # Weights/biases: full-array blocks with a constant index_map -> resident.
    const = lambda arr: pl.BlockSpec(arr.shape, lambda i: (0,) * arr.ndim)

    flops = 2 * B_pad * (IN_DIM * H1_P + H1_P * H2_P + H2_P * H3_P + H3_P * OUT_P)
    transcendentals = B_pad * (H1_P + H2_P + H3_P + OUT_P)
    weight_bytes = sum(int(w.size) * w.dtype.itemsize + int(b.size) * 4
                       for (w, b) in prepared)
    bytes_accessed = weight_bytes + B_pad * (IN_DIM * 2 + OUT_P * 2)

    out = pl.pallas_call(
        make_mlp_kernel(chunks),
        out_shape=jax.ShapeDtypeStruct((B_pad, OUT_P), jnp.bfloat16),
        grid_spec=pl.GridSpec(
            grid=(B_pad // TB,),
            in_specs=[
                pl.BlockSpec((TB, IN_DIM), lambda i: (i, 0)),
                const(w1), const(b1),
                const(w2), const(b2),
                const(w3), const(b3),
                const(w4), const(b4),
            ],
            out_specs=pl.BlockSpec((TB, OUT_P), lambda i: (i, 0)),
        ),
        compiler_params=pltpu.CompilerParams(
            dimension_semantics=("parallel",),
            vmem_limit_bytes=32 * 1024 * 1024,
        ),
        cost_estimate=pl.CostEstimate(
            flops=flops,
            transcendentals=transcendentals,
            bytes_accessed=bytes_accessed,
        ),
    )(x2d, w1, b1, w2, b2, w3, b3, w4, b4)

    # Drop batch padding and the zero-padded output lanes; upcast to f32.
    return out[:B, :OUT].astype(jnp.float32)


def init_params(key):
    """Deterministic init mimicking nn.Linear (uniform +-1/sqrt(fan_in)).
    PyTorch layout: W is (out, in), b is (out,)."""
    dims = [(IN_DIM, H1), (H1, H2), (H2, H3), (H3, OUT)]
    params = []
    for fan_in, fan_out in dims:
        key, kw, kb = jax.random.split(key, 3)
        bound = 1.0 / jnp.sqrt(fan_in)
        w = jax.random.uniform(kw, (fan_out, fan_in), jnp.float32, -bound, bound)
        b = jax.random.uniform(kb, (fan_out,), jnp.float32, -bound, bound)
        params.append((w, b))
    return params


def reference_forward(x, params):
    """Pure-JAX f32 reference matching the PyTorch module."""
    h = x.reshape(-1, IN_DIM).astype(jnp.float32)
    for (w, b) in params:
        h = jax.nn.sigmoid(h @ w.T + b)
    return h


if __name__ == "__main__":
    key = jax.random.PRNGKey(0)
    kp, kx = jax.random.split(key)

    params = init_params(kp)
    # MNIST-like input: batch=8, NCHW (8, 1, 28, 28)
    x = jax.random.normal(kx, (8, 1, 28, 28), jnp.float32)

    out = mlp_forward(x, params)
    out = jax.block_until_ready(out)

    ref = reference_forward(x, params)
    assert out.shape == (8, 10), out.shape
    # bf16 inputs/weights/activations on the MXU + bf16 output store ->
    # loosened tolerance vs the f32 reference.
    assert jnp.allclose(out, ref, atol=3e-2, rtol=3e-2), "mismatch vs reference"

    print("KERNEL_OK")
</pallas_src>

<mosaic_0001>
module attributes {stable_mosaic.version = 11 : i64} {
  func.func @mlp_kernel(%arg0: i32, %arg1: memref<16x784xbf16, #tpu.memory_space<vmem>>, %arg2: memref<784x256xbf16, #tpu.memory_space<vmem>>, %arg3: memref<1x256xf32, #tpu.memory_space<vmem>>, %arg4: memref<256x128xbf16, #tpu.memory_space<vmem>>, %arg5: memref<1x128xf32, #tpu.memory_space<vmem>>, %arg6: memref<128x128xbf16, #tpu.memory_space<vmem>>, %arg7: memref<1x128xf32, #tpu.memory_space<vmem>>, %arg8: memref<128x128xbf16, #tpu.memory_space<vmem>>, %arg9: memref<1x128xf32, #tpu.memory_space<vmem>>, %arg10: memref<16x128xbf16, #tpu.memory_space<vmem>>) attributes {dimension_semantics = [#tpu.dimension_semantics<parallel>], iteration_bounds = array<i64: 1>, scalar_prefetch = 0 : i64, scratch_operands = 0 : i64, tpu.core_type = #tpu.core_type<tc>, window_params = [{transform_indices = @transform_0, window_bounds = array<i64: 16, 784>}, {pipeline_mode = #tpu.pipeline_mode<synchronous>, transform_indices = @transform_1, window_bounds = array<i64: 784, 256>}, {pipeline_mode = #tpu.pipeline_mode<synchronous>, transform_indices = @transform_2, window_bounds = array<i64: 1, 256>}, {pipeline_mode = #tpu.pipeline_mode<synchronous>, transform_indices = @transform_3, window_bounds = array<i64: 256, 128>}, {pipeline_mode = #tpu.pipeline_mode<synchronous>, transform_indices = @transform_4, window_bounds = array<i64: 1, 128>}, {pipeline_mode = #tpu.pipeline_mode<synchronous>, transform_indices = @transform_5, window_bounds = array<i64: 128, 128>}, {pipeline_mode = #tpu.pipeline_mode<synchronous>, transform_indices = @transform_6, window_bounds = array<i64: 1, 128>}, {pipeline_mode = #tpu.pipeline_mode<synchronous>, transform_indices = @transform_7, window_bounds = array<i64: 128, 128>}, {pipeline_mode = #tpu.pipeline_mode<synchronous>, transform_indices = @transform_8, window_bounds = array<i64: 1, 128>}, {transform_indices = @transform_9, window_bounds = array<i64: 16, 128>}]} {
    %c0 = arith.constant 0 : index
    %c0_0 = arith.constant 0 : index
    %0 = vector.load %arg1[%c0, %c0_0] : memref<16x784xbf16, #tpu.memory_space<vmem>>, vector<16x784xbf16>
    %c0_1 = arith.constant 0 : index
    %c0_2 = arith.constant 0 : index
    %1 = vector.load %arg2[%c0_1, %c0_2] : memref<784x256xbf16, #tpu.memory_space<vmem>>, vector<784x256xbf16>
    %cst = arith.constant dense<0.000000e+00> : vector<16x256xf32>
    %2 = tpu.matmul %0, %1, %cst {dimension_numbers = #tpu.dot_dimension_numbers<[1], [0], [0], [1], [0, 0, 1, 1], [], []>} : vector<16x784xbf16>, vector<784x256xbf16>, vector<16x256xf32> -> vector<16x256xf32>
    %c0_3 = arith.constant 0 : index
    %c0_4 = arith.constant 0 : index
    %3 = vector.load %arg3[%c0_3, %c0_4] : memref<1x256xf32, #tpu.memory_space<vmem>>, vector<1x256xf32>
    %4 = vector.broadcast %3 : vector<1x256xf32> to vector<16x256xf32>
    %5 = arith.addf %2, %4 : vector<16x256xf32>
    %cst_5 = arith.constant 5.000000e-01 : f32
    %6 = vector.broadcast %cst_5 : f32 to vector<16x256xf32>
    %7 = arith.mulf %5, %6 : vector<16x256xf32>
    %8 = math.tanh %7 : vector<16x256xf32>
    %cst_6 = arith.constant 5.000000e-01 : f32
    %9 = vector.broadcast %cst_6 : f32 to vector<16x256xf32>
    %10 = arith.mulf %8, %9 : vector<16x256xf32>
    %cst_7 = arith.constant 5.000000e-01 : f32
    %11 = vector.broadcast %cst_7 : f32 to vector<16x256xf32>
    %12 = arith.addf %10, %11 : vector<16x256xf32>
    %13 = arith.truncf %12 : vector<16x256xf32> to vector<16x256xbf16>
    %c0_8 = arith.constant 0 : index
    %c0_9 = arith.constant 0 : index
    %14 = vector.load %arg4[%c0_8, %c0_9] : memref<256x128xbf16, #tpu.memory_space<vmem>>, vector<256x128xbf16>
    %cst_10 = arith.constant dense<0.000000e+00> : vector<16x128xf32>
    %15 = tpu.matmul %13, %14, %cst_10 {dimension_numbers = #tpu.dot_dimension_numbers<[1], [0], [0], [1], [0, 0, 1, 1], [], []>} : vector<16x256xbf16>, vector<256x128xbf16>, vector<16x128xf32> -> vector<16x128xf32>
    %c0_11 = arith.constant 0 : index
    %c0_12 = arith.constant 0 : index
    %16 = vector.load %arg5[%c0_11, %c0_12] : memref<1x128xf32, #tpu.memory_space<vmem>>, vector<1x128xf32>
    %17 = vector.broadcast %16 : vector<1x128xf32> to vector<16x128xf32>
    %18 = arith.addf %15, %17 : vector<16x128xf32>
    %cst_13 = arith.constant 5.000000e-01 : f32
    %19 = vector.broadcast %cst_13 : f32 to vector<16x128xf32>
    %20 = arith.mulf %18, %19 : vector<16x128xf32>
    %21 = math.tanh %20 : vector<16x128xf32>
    %cst_14 = arith.constant 5.000000e-01 : f32
    %22 = vector.broadcast %cst_14 : f32 to vector<16x128xf32>
    %23 = arith.mulf %21, %22 : vector<16x128xf32>
    %cst_15 = arith.constant 5.000000e-01 : f32
    %24 = vector.broadcast %cst_15 : f32 to vector<16x128xf32>
    %25 = arith.addf %23, %24 : vector<16x128xf32>
    %26 = arith.truncf %25 : vector<16x128xf32> to vector<16x128xbf16>
    %c0_16 = arith.constant 0 : index
    %c0_17 = arith.constant 0 : index
    %27 = vector.load %arg6[%c0_16, %c0_17] : memref<128x128xbf16, #tpu.memory_space<vmem>>, vector<128x128xbf16>
    %cst_18 = arith.constant dense<0.000000e+00> : vector<16x128xf32>
    %28 = tpu.matmul %26, %27, %cst_18 {dimension_numbers = #tpu.dot_dimension_numbers<[1], [0], [0], [1], [0, 0, 1, 1], [], []>} : vector<16x128xbf16>, vector<128x128xbf16>, vector<16x128xf32> -> vector<16x128xf32>
    %c0_19 = arith.constant 0 : index
    %c0_20 = arith.constant 0 : index
    %29 = vector.load %arg7[%c0_19, %c0_20] : memref<1x128xf32, #tpu.memory_space<vmem>>, vector<1x128xf32>
    %30 = vector.broadcast %29 : vector<1x128xf32> to vector<16x128xf32>
    %31 = arith.addf %28, %30 : vector<16x128xf32>
    %cst_21 = arith.constant 5.000000e-01 : f32
    %32 = vector.broadcast %cst_21 : f32 to vector<16x128xf32>
    %33 = arith.mulf %31, %32 : vector<16x128xf32>
    %34 = math.tanh %33 : vector<16x128xf32>
    %cst_22 = arith.constant 5.000000e-01 : f32
    %35 = vector.broadcast %cst_22 : f32 to vector<16x128xf32>
    %36 = arith.mulf %34, %35 : vector<16x128xf32>
    %cst_23 = arith.constant 5.000000e-01 : f32
    %37 = vector.broadcast %cst_23 : f32 to vector<16x128xf32>
    %38 = arith.addf %36, %37 : vector<16x128xf32>
    %39 = arith.truncf %38 : vector<16x128xf32> to vector<16x128xbf16>
    %c0_24 = arith.constant 0 : index
    %c0_25 = arith.constant 0 : index
    %40 = vector.load %arg8[%c0_24, %c0_25] : memref<128x128xbf16, #tpu.memory_space<vmem>>, vector<128x128xbf16>
    %cst_26 = arith.constant dense<0.000000e+00> : vector<16x128xf32>
    %41 = tpu.matmul %39, %40, %cst_26 {dimension_numbers = #tpu.dot_dimension_numbers<[1], [0], [0], [1], [0, 0, 1, 1], [], []>} : vector<16x128xbf16>, vector<128x128xbf16>, vector<16x128xf32> -> vector<16x128xf32>
    %c0_27 = arith.constant 0 : index
    %c0_28 = arith.constant 0 : index
    %42 = vector.load %arg9[%c0_27, %c0_28] : memref<1x128xf32, #tpu.memory_space<vmem>>, vector<1x128xf32>
    %43 = vector.broadcast %42 : vector<1x128xf32> to vector<16x128xf32>
    %44 = arith.addf %41, %43 : vector<16x128xf32>
    %cst_29 = arith.constant 5.000000e-01 : f32
    %45 = vector.broadcast %cst_29 : f32 to vector<16x128xf32>
    %46 = arith.mulf %44, %45 : vector<16x128xf32>
    %47 = math.tanh %46 : vector<16x128xf32>
    %cst_30 = arith.constant 5.000000e-01 : f32
    %48 = vector.broadcast %cst_30 : f32 to vector<16x128xf32>
    %49 = arith.mulf %47, %48 : vector<16x128xf32>
    %cst_31 = arith.constant 5.000000e-01 : f32
    %50 = vector.broadcast %cst_31 : f32 to vector<16x128xf32>
    %51 = arith.addf %49, %50 : vector<16x128xf32>
    %52 = arith.truncf %51 : vector<16x128xf32> to vector<16x128xbf16>
    %c0_32 = arith.constant 0 : index
    %c0_33 = arith.constant 0 : index
    %53 = vector.load %arg10[%c0_32, %c0_33] : memref<16x128xbf16, #tpu.memory_space<vmem>>, vector<16x128xbf16>
    tpu.vector_store %arg10[%c0_32, %c0_33], %52 {strides = array<i32>} : memref<16x128xbf16, #tpu.memory_space<vmem>>, vector<16x128xbf16>,
    return
  }
  func.func @transform_0(%arg0: i32) -> (i32, i32) {
    %c0_i32 = arith.constant 0 : i32
    %c0_i32_0 = arith.constant 0 : i32
    return %arg0, %c0_i32 : i32, i32
  }
  func.func @transform_1(%arg0: i32) -> (i32, i32) {
    %c0_i32 = arith.constant 0 : i32
    %c0_i32_0 = arith.constant 0 : i32
    %c0_i32_1 = arith.constant 0 : i32
    return %c0_i32, %c0_i32_0 : i32, i32
  }
  func.func @transform_2(%arg0: i32) -> (i32, i32) {
    %c0_i32 = arith.constant 0 : i32
    %c0_i32_0 = arith.constant 0 : i32
    %c0_i32_1 = arith.constant 0 : i32
    return %c0_i32, %c0_i32_0 : i32, i32
  }
  func.func @transform_3(%arg0: i32) -> (i32, i32) {
    %c0_i32 = arith.constant 0 : i32
    %c0_i32_0 = arith.constant 0 : i32
    %c0_i32_1 = arith.constant 0 : i32
    return %c0_i32, %c0_i32_0 : i32, i32
  }
  func.func @transform_4(%arg0: i32) -> (i32, i32) {
    %c0_i32 = arith.constant 0 : i32
    %c0_i32_0 = arith.constant 0 : i32
    %c0_i32_1 = arith.constant 0 : i32
    return %c0_i32, %c0_i32_0 : i32, i32
  }
  func.func @transform_5(%arg0: i32) -> (i32, i32) {
    %c0_i32 = arith.constant 0 : i32
    %c0_i32_0 = arith.constant 0 : i32
    %c0_i32_1 = arith.constant 0 : i32
    return %c0_i32, %c0_i32_0 : i32, i32
  }
  func.func @transform_6(%arg0: i32) -> (i32, i32) {
    %c0_i32 = arith.constant 0 : i32
    %c0_i32_0 = arith.constant 0 : i32
    %c0_i32_1 = arith.constant 0 : i32
    return %c0_i32, %c0_i32_0 : i32, i32
  }
  func.func @transform_7(%arg0: i32) -> (i32, i32) {
    %c0_i32 = arith.constant 0 : i32
    %c0_i32_0 = arith.constant 0 : i32
    %c0_i32_1 = arith.constant 0 : i32
    return %c0_i32, %c0_i32_0 : i32, i32
  }
  func.func @transform_8(%arg0: i32) -> (i32, i32) {
    %c0_i32 = arith.constant 0 : i32
    %c0_i32_0 = arith.constant 0 : i32
    %c0_i32_1 = arith.constant 0 : i32
    return %c0_i32, %c0_i32_0 : i32, i32
  }
  func.func @transform_9(%arg0: i32) -> (i32, i32) {
    %c0_i32 = arith.constant 0 : i32
    %c0_i32_0 = arith.constant 0 : i32
    return %arg0, %c0_i32 : i32, i32
  }
}

</mosaic_0001>

<llo_original>
// kernel: tpu_custom_call.1
$region0: #{tpu_custom_call.1}
  #allocation0 [shape = 'u32[]', space=smem, size = 0x4, offset = 0x4, fixed_abs, tag = 'smem constant byte address 0x4 - core index']
  #allocation1 [shape = 'u32[72,128]{1,0:T(1,128)}', space=vmem, size = 0x9000, scoped, tag = 'internal scratch']
  %s0 = inlined_call_operand.hbm [shape: bf16[16,784], index: 0, kind: input, shape index: {}]
  %s1 = inlined_call_operand.hbm [shape: bf16[784,256], index: 1, kind: input, shape index: {}]
  %s2 = inlined_call_operand.hbm [shape: f32[1,256], index: 2, kind: input, shape index: {}]
  %s3 = inlined_call_operand.hbm [shape: bf16[256,128], index: 3, kind: input, shape index: {}]
  %s4 = inlined_call_operand.vmem [shape: f32[1,128], index: 4, kind: input, shape index: {}]
  %s5 = inlined_call_operand.hbm [shape: bf16[128,128], index: 5, kind: input, shape index: {}]
  %s6 = inlined_call_operand.vmem [shape: f32[1,128], index: 6, kind: input, shape index: {}]
  %s7 = inlined_call_operand.hbm [shape: bf16[128,128], index: 7, kind: input, shape index: {}]
  %s8 = inlined_call_operand.vmem [shape: f32[1,128], index: 8, kind: input, shape index: {}]
  %s9 = inlined_call_operand.hbm [shape: bf16[16,128], index: 9, kind: output, shape index: {}]
  %s10 = sld [smem:[#allocation0]]
  $region70: #{tpu_custom_call.1} parent=0
    _
  %s12 = ssub.s32 1, %s10
  %s13 = scalar_select 0, %s12, %s10
  $region1: #{tpu_custom_call.1} parent=0
    #allocation2 [shape = 'u8[28672]{0}', space=vmem, size = 0x7000, scoped, tag = 'input window, operand 0, single buffered']
    #allocation3 [shape = 's32[1]{0}', space=sflag, size = 0x4, scoped, tag = 'scoped memory for tpu_custom_call.1']
    #allocation4 [shape = 's32[1]{0}', space=sflag, size = 0x4, scoped, tag = 'scoped memory for tpu_custom_call.1']
    #allocation5 [shape = 'u8[401408]{0}', space=vmem, size = 0x62000, scoped, tag = 'input window, operand 1, single buffered']
    #allocation6 [shape = 's32[1]{0}', space=sflag, size = 0x4, scoped, tag = 'scoped memory for tpu_custom_call.1']
    #allocation7 [shape = 'u8[1024]{0}', space=vmem, size = 0x400, scoped, tag = 'input window, operand 2, single buffered']
    #allocation8 [shape = 'u8[65536]{0}', space=vmem, size = 0x10000, scoped, tag = 'input window, operand 3, single buffered']
    #allocation9 [shape = 's32[1]{0}', space=sflag, size = 0x4, scoped, tag = 'scoped memory for tpu_custom_call.1']
    #allocation10 [shape = 'u8[32768]{0}', space=vmem, size = 0x8000, scoped, tag = 'input window, operand 5, single buffered']
    #allocation11 [shape = 'u8[32768]{0}', space=vmem, size = 0x8000, scoped, tag = 'input window, operand 7, single buffered']
    #allocation12 [shape = 's32[1]{0}', space=sflag, size = 0x4, scoped, tag = 'scoped memory for tpu_custom_call.1']
    #allocation13 [shape = 'u8[4096]{0}', space=vmem, size = 0x1000, scoped, tag = 'output window, operand 0, single buffered']
    %14 = vsyncpa [#allocation3], 0
    %15 = vsyncpa [#allocation6], 0
    %16 = vsyncpa [#allocation9], 0
    %17 = vsyncpa [#allocation12], 0
    %18 = vsyncpa [#allocation4], 0
    // Predicated region
    $region2: #{tpu_custom_call.1} parent=1 // pred_check
      _
    $region3: #{tpu_custom_call.1} parent=1 // pred_check_branch
      %20 = sbr.rel (0) target = $region5
    $region4: #{tpu_custom_call.1} parent=1 // pred_region
      %22 = vsyncadd [#allocation3], 0
      %s23 = sshll.u32 %s0, 4
      %s24 = int_to_ptr.hbm [resolvable:$true] %s23
      %s25 = sshll.u32 [#allocation2], 4
      %s26 = int_to_ptr.vmem [resolvable:$true] %s25
      %31 = dma.hbm_to_vmem [thread:$0]  %s24, 896, %s26, [#allocation3], 448, 448, 28
    $region5: #{tpu_custom_call.1} parent=1 // pred_fallthru
      _
    // Predicated region
    $region6: #{tpu_custom_call.1} parent=1 // pred_check
      _
    $region7: #{tpu_custom_call.1} parent=1 // pred_check_branch
      %33 = sbr.rel (0) target = $region9
    $region8: #{tpu_custom_call.1} parent=1 // pred_region
      %35 = vsyncadd [#allocation6], 0
      %s36 = sshll.u32 %s1, 4
      %s37 = int_to_ptr.hbm [resolvable:$true] %s36
      %s38 = sshll.u32 [#allocation5], 4
      %s39 = int_to_ptr.vmem [resolvable:$true] %s38
      %44 = dma.hbm_to_vmem [thread:$0]  %s37, 12544, %s39, [#allocation6], 128, 128, 8
    $region9: #{tpu_custom_call.1} parent=1 // pred_fallthru
      _
    // Predicated region
    $region10: #{tpu_custom_call.1} parent=1 // pred_check
      _
    $region11: #{tpu_custom_call.1} parent=1 // pred_check_branch
      %46 = sbr.rel (0) target = $region13
    $region12: #{tpu_custom_call.1} parent=1 // pred_region
      %48 = vsyncadd [#allocation6], 0
      %s50 = sshll.u32 %s2, 4
      %s51 = int_to_ptr.hbm [resolvable:$true] %s50
      %s52 = sshll.u32 [#allocation7], 4
      %s53 = int_to_ptr.vmem [resolvable:$true] %s52
      %55 = dma.hbm_to_vmem [thread:$0]  %s51, 32, %s53, [#allocation6]
    $region13: #{tpu_custom_call.1} parent=1 // pred_fallthru
      _
    // Predicated region
    $region14: #{tpu_custom_call.1} parent=1 // pred_check
      _
    $region15: #{tpu_custom_call.1} parent=1 // pred_check_branch
      %57 = sbr.rel (0) target = $region17
    $region16: #{tpu_custom_call.1} parent=1 // pred_region
      %59 = vsyncadd [#allocation9], 0
      %s60 = sshll.u32 %s3, 4
      %s61 = int_to_ptr.hbm [resolvable:$true] %s60
      %s62 = sshll.u32 [#allocation8], 4
      %s63 = int_to_ptr.vmem [resolvable:$true] %s62
      %68 = dma.hbm_to_vmem [thread:$0]  %s61, 2048, %s63, [#allocation9], 64, 64, 4
    $region17: #{tpu_custom_call.1} parent=1 // pred_fallthru
      _
    // Predicated region
    $region18: #{tpu_custom_call.1} parent=1 // pred_check
      _
    $region19: #{tpu_custom_call.1} parent=1 // pred_check_branch
      %70 = sbr.rel (0) target = $region21
    $region20: #{tpu_custom_call.1} parent=1 // pred_region
      _
    $region21: #{tpu_custom_call.1} parent=1 // pred_fallthru
      _
    // Predicated region
    $region22: #{tpu_custom_call.1} parent=1 // pred_check
      _
    $region23: #{tpu_custom_call.1} parent=1 // pred_check_branch
      %72 = sbr.rel (0) target = $region25
    $region24: #{tpu_custom_call.1} parent=1 // pred_region
      %74 = vsyncadd [#allocation9], 0
      %s75 = sshll.u32 %s5, 4
      %s76 = int_to_ptr.hbm [resolvable:$true] %s75
      %s77 = sshll.u32 [#allocation10], 4
      %s78 = int_to_ptr.vmem [resolvable:$true] %s77
      %83 = dma.hbm_to_vmem [thread:$0]  %s76, 1024, %s78, [#allocation9], 64, 64, 4
    $region25: #{tpu_custom_call.1} parent=1 // pred_fallthru
      _
    // Predicated region
    $region26: #{tpu_custom_call.1} parent=1 // pred_check
      _
    $region27: #{tpu_custom_call.1} parent=1 // pred_check_branch
      %85 = sbr.rel (0) target = $region29
    $region28: #{tpu_custom_call.1} parent=1 // pred_region
      _
    $region29: #{tpu_custom_call.1} parent=1 // pred_fallthru
      _
    // Predicated region
    $region30: #{tpu_custom_call.1} parent=1 // pred_check
      _
    $region31: #{tpu_custom_call.1} parent=1 // pred_check_branch
      %87 = sbr.rel (0) target = $region33
    $region32: #{tpu_custom_call.1} parent=1 // pred_region
      %89 = vsyncadd [#allocation12], 0
      %s90 = sshll.u32 %s7, 4
      %s91 = int_to_ptr.hbm [resolvable:$true] %s90
      %s92 = sshll.u32 [#allocation11], 4
      %s93 = int_to_ptr.vmem [resolvable:$true] %s92
      %98 = dma.hbm_to_vmem [thread:$0]  %s91, 1024, %s93, [#allocation12], 64, 64, 4
    $region33: #{tpu_custom_call.1} parent=1 // pred_fallthru
      _
    // Predicated region
    $region34: #{tpu_custom_call.1} parent=1 // pred_check
      _
    $region35: #{tpu_custom_call.1} parent=1 // pred_check_branch
      %100 = sbr.rel (0) target = $region37
    $region36: #{tpu_custom_call.1} parent=1 // pred_region
      _
    $region37: #{tpu_custom_call.1} parent=1 // pred_fallthru
      _
    // Predicated region
    $region38: #{tpu_custom_call.1} parent=1 // pred_check
      _
    $region39: #{tpu_custom_call.1} parent=1 // pred_check_branch
      %102 = sbr.rel (0) target = $region41
    $region40: #{tpu_custom_call.1} parent=1 // pred_region
      %104 = dma.done [#allocation3], 896
    $region41: #{tpu_custom_call.1} parent=1 // pred_fallthru
      _
    // Predicated region
    $region42: #{tpu_custom_call.1} parent=1 // pred_check
      _
    $region43: #{tpu_custom_call.1} parent=1 // pred_check_branch
      %106 = sbr.rel (0) target = $region45
    $region44: #{tpu_custom_call.1} parent=1 // pred_region
      %108 = dma.done [#allocation6], 12544
    $region45: #{tpu_custom_call.1} parent=1 // pred_fallthru
      _
    // Predicated region
    $region46: #{tpu_custom_call.1} parent=1 // pred_check
      _
    $region47: #{tpu_custom_call.1} parent=1 // pred_check_branch
      %110 = sbr.rel (0) target = $region49
    $region48: #{tpu_custom_call.1} parent=1 // pred_region
      %112 = dma.done [#allocation6], 32
    $region49: #{tpu_custom_call.1} parent=1 // pred_fallthru
      _
    // Predicated region
    $region50: #{tpu_custom_call.1} parent=1 // pred_check
      _
    $region51: #{tpu_custom_call.1} parent=1 // pred_check_branch
      %114 = sbr.rel (0) target = $region53
    $region52: #{tpu_custom_call.1} parent=1 // pred_region
      %116 = dma.done [#allocation9], 2048
    $region53: #{tpu_custom_call.1} parent=1 // pred_fallthru
      _
    // Predicated region
    $region54: #{tpu_custom_call.1} parent=1 // pred_check
      _
    $region55: #{tpu_custom_call.1} parent=1 // pred_check_branch
      %118 = sbr.rel (0) target = $region57
    $region56: #{tpu_custom_call.1} parent=1 // pred_region
      %120 = dma.done [#allocation9], 1024
    $region57: #{tpu_custom_call.1} parent=1 // pred_fallthru
      _
    // Predicated region
    $region58: #{tpu_custom_call.1} parent=1 // pred_check
      _
    $region59: #{tpu_custom_call.1} parent=1 // pred_check_branch
      %122 = sbr.rel (0) target = $region61
    $region60: #{tpu_custom_call.1} parent=1 // pred_region
      %124 = dma.done [#allocation12], 1024
    $region61: #{tpu_custom_call.1} parent=1 // pred_fallthru
      _
    %v126 = vld [vmem:[#allocation2] sm:$0xff]
    %v127 = vld [vmem:[#allocation2 + $0x8] sm:$0xff]
    %v128 = vld [vmem:[#allocation2 + $0x10] sm:$0xff]
    %v129 = vld [vmem:[#allocation2 + $0x18] sm:$0xf]
    %v130 = vld [vmem:[#allocation2 + $0x1c] sm:$0xff]
    %v131 = vld [vmem:[#allocation2 + $0x24] sm:$0xff]
    %v132 = vld [vmem:[#allocation2 + $0x2c] sm:$0xff]
    %v133 = vld [vmem:[#allocation2 + $0x34] sm:$0xf]
    %v134 = vld [vmem:[#allocation5] sm:$0xff]
    %v135 = vld [vmem:[#allocation5 + $0x8] sm:$0xff]
    %v136 = vld [vmem:[#allocation5 + $0x10] sm:$0xff]
    %v137 = vld [vmem:[#allocation5 + $0x18] sm:$0xff]
    %v138 = vld [vmem:[#allocation5 + $0x20] sm:$0xff]
    %v139 = vld [vmem:[#allocation5 + $0x28] sm:$0xff]
    %v140 = vld [vmem:[#allocation5 + $0x30] sm:$0xff]
    %v141 = vld [vmem:[#allocation5 + $0x38] sm:$0xff]
    %v142 = vld [vmem:[#allocation5 + $0x40] sm:$0xff]
    %v143 = vld [vmem:[#allocation5 + $0x48] sm:$0xff]
    %v144 = vld [vmem:[#allocation5 + $0x50] sm:$0xff]
    %v145 = vld [vmem:[#allocation5 + $0x58] sm:$0xff]
    %v146 = vld [vmem:[#allocation5 + $0x60] sm:$0xff]
    %v147 = vld [vmem:[#allocation5 + $0x68] sm:$0xff]
    %v148 = vld [vmem:[#allocation5 + $0x70] sm:$0xff]
    %v149 = vld [vmem:[#allocation5 + $0x78] sm:$0xff]
    %v150 = vld [vmem:[#allocation5 + $0x80] sm:$0xff]
    %v151 = vld [vmem:[#allocation5 + $0x88] sm:$0xff]
    %v152 = vld [vmem:[#allocation5 + $0x90] sm:$0xff]
    %v153 = vld [vmem:[#allocation5 + $0x98] sm:$0xff]
    %v154 = vld [vmem:[#allocation5 + $0xa0] sm:$0xff]
    %v155 = vld [vmem:[#allocation5 + $0xa8] sm:$0xff]
    %v156 = vld [vmem:[#allocation5 + $0xb0] sm:$0xff]
    %v157 = vld [vmem:[#allocation5 + $0xb8] sm:$0xff]
    %v158 = vld [vmem:[#allocation5 + $0xc0] sm:$0xff]
    %v159 = vld [vmem:[#allocation5 + $0xc8] sm:$0xff]
    %v160 = vld [vmem:[#allocation5 + $0xd0] sm:$0xff]
    %v161 = vld [vmem:[#allocation5 + $0xd8] sm:$0xff]
    %v162 = vld [vmem:[#allocation5 + $0xe0] sm:$0xff]
    %v163 = vld [vmem:[#allocation5 + $0xe8] sm:$0xff]
    %v164 = vld [vmem:[#allocation5 + $0xf0] sm:$0xff]
    %v165 = vld [vmem:[#allocation5 + $0xf8] sm:$0xff]
    %v166 = vld [vmem:[#allocation5 + $0x100] sm:$0xff]
    %v167 = vld [vmem:[#allocation5 + $0x108] sm:$0xff]
    %v168 = vld [vmem:[#allocation5 + $0x110] sm:$0xff]
    %v169 = vld [vmem:[#allocation5 + $0x118] sm:$0xff]
    %v170 = vld [vmem:[#allocation5 + $0x120] sm:$0xff]
    %v171 = vld [vmem:[#allocation5 + $0x128] sm:$0xff]
    %v172 = vld [vmem:[#allocation5 + $0x130] sm:$0xff]
    %v173 = vld [vmem:[#allocation5 + $0x138] sm:$0xff]
    %v174 = vld [vmem:[#allocation5 + $0x140] sm:$0xff]
    %v175 = vld [vmem:[#allocation5 + $0x148] sm:$0xff]
    %v176 = vld [vmem:[#allocation5 + $0x150] sm:$0xff]
    %v177 = vld [vmem:[#allocation5 + $0x158] sm:$0xff]
    %v178 = vld [vmem:[#allocation5 + $0x160] sm:$0xff]
    %v179 = vld [vmem:[#allocation5 + $0x168] sm:$0xff]
    %v180 = vld [vmem:[#allocation5 + $0x170] sm:$0xff]
    %v181 = vld [vmem:[#allocation5 + $0x178] sm:$0xff]
    %v182 = vld [vmem:[#allocation5 + $0x180] sm:$0xff]
    %v183 = vld [vmem:[#allocation5 + $0x188] sm:$0xff]
    %v184 = vld [vmem:[#allocation5 + $0x190] sm:$0xff]
    %v185 = vld [vmem:[#allocation5 + $0x198] sm:$0xff]
    %v186 = vld [vmem:[#allocation5 + $0x1a0] sm:$0xff]
    %v187 = vld [vmem:[#allocation5 + $0x1a8] sm:$0xff]
    %v188 = vld [vmem:[#allocation5 + $0x1b0] sm:$0xff]
    %v189 = vld [vmem:[#allocation5 + $0x1b8] sm:$0xff]
    %v190 = vld [vmem:[#allocation5 + $0x1c0] sm:$0xff]
    %v191 = vld [vmem:[#allocation5 + $0x1c8] sm:$0xff]
    %v192 = vld [vmem:[#allocation5 + $0x1d0] sm:$0xff]
    %v193 = vld [vmem:[#allocation5 + $0x1d8] sm:$0xff]
    %v194 = vld [vmem:[#allocation5 + $0x1e0] sm:$0xff]
    %v195 = vld [vmem:[#allocation5 + $0x1e8] sm:$0xff]
    %v196 = vld [vmem:[#allocation5 + $0x1f0] sm:$0xff]
    %v197 = vld [vmem:[#allocation5 + $0x1f8] sm:$0xff]
    %v198 = vld [vmem:[#allocation5 + $0x200] sm:$0xff]
    %v199 = vld [vmem:[#allocation5 + $0x208] sm:$0xff]
    %v200 = vld [vmem:[#allocation5 + $0x210] sm:$0xff]
    %v201 = vld [vmem:[#allocation5 + $0x218] sm:$0xff]
    %v202 = vld [vmem:[#allocation5 + $0x220] sm:$0xff]
    %v203 = vld [vmem:[#allocation5 + $0x228] sm:$0xff]
    %v204 = vld [vmem:[#allocation5 + $0x230] sm:$0xff]
    %v205 = vld [vmem:[#allocation5 + $0x238] sm:$0xff]
    %v206 = vld [vmem:[#allocation5 + $0x240] sm:$0xff]
    %v207 = vld [vmem:[#allocation5 + $0x248] sm:$0xff]
    %v208 = vld [vmem:[#allocation5 + $0x250] sm:$0xff]
    %v209 = vld [vmem:[#allocation5 + $0x258] sm:$0xff]
    %v210 = vld [vmem:[#allocation5 + $0x260] sm:$0xff]
    %v211 = vld [vmem:[#allocation5 + $0x268] sm:$0xff]
    %v212 = vld [vmem:[#allocation5 + $0x270] sm:$0xff]
    %v213 = vld [vmem:[#allocation5 + $0x278] sm:$0xff]
    %v214 = vld [vmem:[#allocation5 + $0x280] sm:$0xff]
    %v215 = vld [vmem:[#allocation5 + $0x288] sm:$0xff]
    %v216 = vld [vmem:[#allocation5 + $0x290] sm:$0xff]
    %v217 = vld [vmem:[#allocation5 + $0x298] sm:$0xff]
    %v218 = vld [vmem:[#allocation5 + $0x2a0] sm:$0xff]
    %v219 = vld [vmem:[#allocation5 + $0x2a8] sm:$0xff]
    %v220 = vld [vmem:[#allocation5 + $0x2b0] sm:$0xff]
    %v221 = vld [vmem:[#allocation5 + $0x2b8] sm:$0xff]
    %v222 = vld [vmem:[#allocation5 + $0x2c0] sm:$0xff]
    %v223 = vld [vmem:[#allocation5 + $0x2c8] sm:$0xff]
    %v224 = vld [vmem:[#allocation5 + $0x2d0] sm:$0xff]
    %v225 = vld [vmem:[#allocation5 + $0x2d8] sm:$0xff]
    %v226 = vld [vmem:[#allocation5 + $0x2e0] sm:$0xff]
    %v227 = vld [vmem:[#allocation5 + $0x2e8] sm:$0xff]
    %v228 = vld [vmem:[#allocation5 + $0x2f0] sm:$0xff]
    %v229 = vld [vmem:[#allocation5 + $0x2f8] sm:$0xff]
    %v230 = vld [vmem:[#allocation5 + $0x300] sm:$0xff]
    %v231 = vld [vmem:[#allocation5 + $0x308] sm:$0xff]
    %v232 = vld [vmem:[#allocation7] sm:$0x3]
    %v234 = vperm.slane %v232, 0
    %v235 = vperm.slane %v232, 1
    %v246 = vunpack.c.l.b16 %v126
    %v247 = vunpack.c.h.b16 %v126
    %v248 = vunpack.c.l.b16 %v127
    %v249 = vunpack.c.h.b16 %v127
    %v250 = vunpack.c.l.b16 %v128
    %v251 = vunpack.c.h.b16 %v128
    %v252 = vunpack.c.l.b16 %v129
    %v253 = vunpack.c.l.b16 %v130
    %v254 = vunpack.c.h.b16 %v130
    %v255 = vunpack.c.l.b16 %v131
    %v256 = vunpack.c.h.b16 %v131
    %v257 = vunpack.c.l.b16 %v132
    %v258 = vunpack.c.h.b16 %v132
    %v259 = vunpack.c.l.b16 %v133
    %v260 = vpack.c.b16 %v253, %v246
    %v261 = vpack.c.b16 %v254, %v247
    %v262 = vpack.c.b16 %v255, %v248
    %v263 = vpack.c.b16 %v256, %v249
    %v264 = vpack.c.b16 %v257, %v250
    %v265 = vpack.c.b16 %v258, %v251
    %v266 = vpack.c.b16 %v259, %v252
    %v371 = vunpack.c.l.b16 %v134
    %v372 = vunpack.c.h.b16 %v134
    %v373 = vunpack.c.l.b16 %v135
    %v374 = vunpack.c.h.b16 %v135
    %v375 = vunpack.c.l.b16 %v136
    %v376 = vunpack.c.h.b16 %v136
    %v377 = vunpack.c.l.b16 %v137
    %v378 = vunpack.c.h.b16 %v137
    %v379 = vunpack.c.l.b16 %v138
    %v380 = vunpack.c.h.b16 %v138
    %v381 = vunpack.c.l.b16 %v139
    %v382 = vunpack.c.h.b16 %v139
    %v383 = vunpack.c.l.b16 %v140
    %v384 = vunpack.c.h.b16 %v140
    %v385 = vunpack.c.l.b16 %v141
    %v386 = vunpack.c.h.b16 %v141
    %v387 = vunpack.c.l.b16 %v142
    %v388 = vunpack.c.h.b16 %v142
    %v389 = vunpack.c.l.b16 %v143
    %v390 = vunpack.c.h.b16 %v143
    %v391 = vunpack.c.l.b16 %v144
    %v392 = vunpack.c.h.b16 %v144
    %v393 = vunpack.c.l.b16 %v145
    %v394 = vunpack.c.h.b16 %v145
    %v395 = vunpack.c.l.b16 %v146
    %v396 = vunpack.c.h.b16 %v146
    %v397 = vunpack.c.l.b16 %v147
    %v398 = vunpack.c.h.b16 %v147
    %v399 = vunpack.c.l.b16 %v148
    %v400 = vunpack.c.h.b16 %v148
    %v401 = vunpack.c.l.b16 %v149
    %v402 = vunpack.c.h.b16 %v149
    %v403 = vunpack.c.l.b16 %v150
    %v404 = vunpack.c.h.b16 %v150
    %v405 = vunpack.c.l.b16 %v151
    %v406 = vunpack.c.h.b16 %v151
    %v407 = vunpack.c.l.b16 %v152
    %v408 = vunpack.c.h.b16 %v152
    %v409 = vunpack.c.l.b16 %v153
    %v410 = vunpack.c.h.b16 %v153
    %v411 = vunpack.c.l.b16 %v154
    %v412 = vunpack.c.h.b16 %v154
    %v413 = vunpack.c.l.b16 %v155
    %v414 = vunpack.c.h.b16 %v155
    %v415 = vunpack.c.l.b16 %v156
    %v416 = vunpack.c.h.b16 %v156
    %v417 = vunpack.c.l.b16 %v157
    %v418 = vunpack.c.h.b16 %v157
    %v419 = vunpack.c.l.b16 %v158
    %v420 = vunpack.c.h.b16 %v158
    %v421 = vunpack.c.l.b16 %v159
    %v422 = vunpack.c.h.b16 %v159
    %v423 = vunpack.c.l.b16 %v160
    %v424 = vunpack.c.h.b16 %v160
    %v425 = vunpack.c.l.b16 %v161
    %v426 = vunpack.c.h.b16 %v161
    %v427 = vunpack.c.l.b16 %v162
    %v428 = vunpack.c.h.b16 %v162
    %v429 = vunpack.c.l.b16 %v163
    %v430 = vunpack.c.h.b16 %v163
    %v431 = vunpack.c.l.b16 %v164
    %v432 = vunpack.c.h.b16 %v164
    %v433 = vunpack.c.l.b16 %v165
    %v434 = vunpack.c.h.b16 %v165
    %v435 = vunpack.c.l.b16 %v166
    %v436 = vunpack.c.h.b16 %v166
    %v437 = vunpack.c.l.b16 %v167
    %v438 = vunpack.c.h.b16 %v167
    %v439 = vunpack.c.l.b16 %v168
    %v440 = vunpack.c.h.b16 %v168
    %v441 = vunpack.c.l.b16 %v169
    %v442 = vunpack.c.h.b16 %v169
    %v443 = vunpack.c.l.b16 %v170
    %v444 = vunpack.c.h.b16 %v170
    %v445 = vunpack.c.l.b16 %v171
    %v446 = vunpack.c.h.b16 %v171
    %v447 = vunpack.c.l.b16 %v172
    %v448 = vunpack.c.h.b16 %v172
    %v449 = vunpack.c.l.b16 %v173
    %v450 = vunpack.c.h.b16 %v173
    %v451 = vunpack.c.l.b16 %v174
    %v452 = vunpack.c.h.b16 %v174
    %v453 = vunpack.c.l.b16 %v175
    %v454 = vunpack.c.h.b16 %v175
    %v455 = vunpack.c.l.b16 %v176
    %v456 = vunpack.c.h.b16 %v176
    %v457 = vunpack.c.l.b16 %v177
    %v458 = vunpack.c.h.b16 %v177
    %v459 = vunpack.c.l.b16 %v178
    %v460 = vunpack.c.h.b16 %v178
    %v461 = vunpack.c.l.b16 %v179
    %v462 = vunpack.c.h.b16 %v179
    %v463 = vunpack.c.l.b16 %v180
    %v464 = vunpack.c.h.b16 %v180
    %v465 = vunpack.c.l.b16 %v181
    %v466 = vunpack.c.h.b16 %v181
    %v467 = vunpack.c.l.b16 %v182
    %v468 = vunpack.c.h.b16 %v182
    %v469 = vunpack.c.l.b16 %v183
    %v470 = vunpack.c.h.b16 %v183
    %v471 = vunpack.c.l.b16 %v184
    %v472 = vunpack.c.h.b16 %v184
    %v473 = vunpack.c.l.b16 %v185
    %v474 = vunpack.c.h.b16 %v185
    %v475 = vunpack.c.l.b16 %v186
    %v476 = vunpack.c.h.b16 %v186
    %v477 = vunpack.c.l.b16 %v187
    %v478 = vunpack.c.h.b16 %v187
    %v479 = vunpack.c.l.b16 %v188
    %v480 = vunpack.c.h.b16 %v188
    %v481 = vunpack.c.l.b16 %v189
    %v482 = vunpack.c.h.b16 %v189
    %v483 = vunpack.c.l.b16 %v190
    %v484 = vunpack.c.h.b16 %v190
    %v485 = vunpack.c.l.b16 %v191
    %v486 = vunpack.c.h.b16 %v191
    %v487 = vunpack.c.l.b16 %v192
    %v488 = vunpack.c.h.b16 %v192
    %v489 = vunpack.c.l.b16 %v193
    %v490 = vunpack.c.h.b16 %v193
    %v491 = vunpack.c.l.b16 %v194
    %v492 = vunpack.c.h.b16 %v194
    %v493 = vunpack.c.l.b16 %v195
    %v494 = vunpack.c.h.b16 %v195
    %v495 = vunpack.c.l.b16 %v196
    %v496 = vunpack.c.h.b16 %v196
    %v497 = vunpack.c.l.b16 %v197
    %v498 = vunpack.c.h.b16 %v197
    %v499 = vunpack.c.l.b16 %v198
    %v500 = vunpack.c.h.b16 %v198
    %v501 = vunpack.c.l.b16 %v199
    %v502 = vunpack.c.h.b16 %v199
    %v503 = vunpack.c.l.b16 %v200
    %v504 = vunpack.c.h.b16 %v200
    %v505 = vunpack.c.l.b16 %v201
    %v506 = vunpack.c.h.b16 %v201
    %v507 = vunpack.c.l.b16 %v202
    %v508 = vunpack.c.h.b16 %v202
    %v509 = vunpack.c.l.b16 %v203
    %v510 = vunpack.c.h.b16 %v203
    %v511 = vunpack.c.l.b16 %v204
    %v512 = vunpack.c.h.b16 %v204
    %v513 = vunpack.c.l.b16 %v205
    %v514 = vunpack.c.h.b16 %v205
    %v515 = vunpack.c.l.b16 %v206
    %v516 = vunpack.c.h.b16 %v206
    %v517 = vunpack.c.l.b16 %v207
    %v518 = vunpack.c.h.b16 %v207
    %v519 = vunpack.c.l.b16 %v208
    %v520 = vunpack.c.h.b16 %v208
    %v521 = vunpack.c.l.b16 %v209
    %v522 = vunpack.c.h.b16 %v209
    %v523 = vunpack.c.l.b16 %v210
    %v524 = vunpack.c.h.b16 %v210
    %v525 = vunpack.c.l.b16 %v211
    %v526 = vunpack.c.h.b16 %v211
    %v527 = vunpack.c.l.b16 %v212
    %v528 = vunpack.c.h.b16 %v212
    %v529 = vunpack.c.l.b16 %v213
    %v530 = vunpack.c.h.b16 %v213
    %v531 = vunpack.c.l.b16 %v214
    %v532 = vunpack.c.h.b16 %v214
    %v533 = vunpack.c.l.b16 %v215
    %v534 = vunpack.c.h.b16 %v215
    %v535 = vunpack.c.l.b16 %v216
    %v536 = vunpack.c.h.b16 %v216
    %v537 = vunpack.c.l.b16 %v217
    %v538 = vunpack.c.h.b16 %v217
    %v539 = vunpack.c.l.b16 %v218
    %v540 = vunpack.c.h.b16 %v218
    %v541 = vunpack.c.l.b16 %v219
    %v542 = vunpack.c.h.b16 %v219
    %v543 = vunpack.c.l.b16 %v220
    %v544 = vunpack.c.h.b16 %v220
    %v545 = vunpack.c.l.b16 %v221
    %v546 = vunpack.c.h.b16 %v221
    %v547 = vunpack.c.l.b16 %v222
    %v548 = vunpack.c.h.b16 %v222
    %v549 = vunpack.c.l.b16 %v223
    %v550 = vunpack.c.h.b16 %v223
    %v551 = vunpack.c.l.b16 %v224
    %v552 = vunpack.c.h.b16 %v224
    %v553 = vunpack.c.l.b16 %v225
    %v554 = vunpack.c.h.b16 %v225
    %v555 = vunpack.c.l.b16 %v226
    %v556 = vunpack.c.h.b16 %v226
    %v557 = vunpack.c.l.b16 %v227
    %v558 = vunpack.c.h.b16 %v227
    %v559 = vunpack.c.l.b16 %v228
    %v560 = vunpack.c.h.b16 %v228
    %v561 = vunpack.c.l.b16 %v229
    %v562 = vunpack.c.h.b16 %v229
    %v563 = vunpack.c.l.b16 %v230
    %v564 = vunpack.c.h.b16 %v230
    %v565 = vunpack.c.l.b16 %v231
    %v566 = vunpack.c.h.b16 %v231
    %v567 = vpack.c.b16 %v373, %v371
    %v568 = vpack.c.b16 %v374, %v372
    %v569 = vpack.c.b16 %v377, %v375
    %v570 = vpack.c.b16 %v378, %v376
    %v571 = vpack.c.b16 %v381, %v379
    %v572 = vpack.c.b16 %v382, %v380
    %v573 = vpack.c.b16 %v385, %v383
    %v574 = vpack.c.b16 %v386, %v384
    %v575 = vpack.c.b16 %v389, %v387
    %v576 = vpack.c.b16 %v390, %v388
    %v577 = vpack.c.b16 %v393, %v391
    %v578 = vpack.c.b16 %v394, %v392
    %v579 = vpack.c.b16 %v397, %v395
    %v580 = vpack.c.b16 %v398, %v396
    %v581 = vpack.c.b16 %v401, %v399
    %v582 = vpack.c.b16 %v402, %v400
    %v583 = vpack.c.b16 %v405, %v403
    %v584 = vpack.c.b16 %v406, %v404
    %v585 = vpack.c.b16 %v409, %v407
    %v586 = vpack.c.b16 %v410, %v408
    %v587 = vpack.c.b16 %v413, %v411
    %v588 = vpack.c.b16 %v414, %v412
    %v589 = vpack.c.b16 %v417, %v415
    %v590 = vpack.c.b16 %v418, %v416
    %v591 = vpack.c.b16 %v421, %v419
    %v592 = vpack.c.b16 %v422, %v420
    %v593 = vpack.c.b16 %v425, %v423
    %v594 = vpack.c.b16 %v426, %v424
    %v595 = vpack.c.b16 %v429, %v427
    %v596 = vpack.c.b16 %v430, %v428
    %v597 = vpack.c.b16 %v433, %v431
    %v598 = vpack.c.b16 %v434, %v432
    %v599 = vpack.c.b16 %v437, %v435
    %v600 = vpack.c.b16 %v438, %v436
    %v601 = vpack.c.b16 %v441, %v439
    %v602 = vpack.c.b16 %v442, %v440
    %v603 = vpack.c.b16 %v445, %v443
    %v604 = vpack.c.b16 %v446, %v444
    %v605 = vpack.c.b16 %v449, %v447
    %v606 = vpack.c.b16 %v450, %v448
    %v607 = vpack.c.b16 %v453, %v451
    %v608 = vpack.c.b16 %v454, %v452
    %v609 = vpack.c.b16 %v457, %v455
    %v610 = vpack.c.b16 %v458, %v456
    %v611 = vpack.c.b16 %v461, %v459
    %v612 = vpack.c.b16 %v462, %v460
    %v613 = vpack.c.b16 %v465, %v463
    %v614 = vpack.c.b16 %v466, %v464
    %v615 = vpack.c.b16 %v469, %v467
    %v616 = vpack.c.b16 %v470, %v468
    %v617 = vpack.c.b16 %v473, %v471
    %v618 = vpack.c.b16 %v474, %v472
    %v619 = vpack.c.b16 %v477, %v475
    %v620 = vpack.c.b16 %v478, %v476
    %v621 = vpack.c.b16 %v481, %v479
    %v622 = vpack.c.b16 %v482, %v480
    %v623 = vpack.c.b16 %v485, %v483
    %v624 = vpack.c.b16 %v486, %v484
    %v625 = vpack.c.b16 %v489, %v487
    %v626 = vpack.c.b16 %v490, %v488
    %v627 = vpack.c.b16 %v493, %v491
    %v628 = vpack.c.b16 %v494, %v492
    %v629 = vpack.c.b16 %v497, %v495
    %v630 = vpack.c.b16 %v498, %v496
    %v631 = vpack.c.b16 %v501, %v499
    %v632 = vpack.c.b16 %v502, %v500
    %v633 = vpack.c.b16 %v505, %v503
    %v634 = vpack.c.b16 %v506, %v504
    %v635 = vpack.c.b16 %v509, %v507
    %v636 = vpack.c.b16 %v510, %v508
    %v637 = vpack.c.b16 %v513, %v511
    %v638 = vpack.c.b16 %v514, %v512
    %v639 = vpack.c.b16 %v517, %v515
    %v640 = vpack.c.b16 %v518, %v516
    %v641 = vpack.c.b16 %v521, %v519
    %v642 = vpack.c.b16 %v522, %v520
    %v643 = vpack.c.b16 %v525, %v523
    %v644 = vpack.c.b16 %v526, %v524
    %v645 = vpack.c.b16 %v529, %v527
    %v646 = vpack.c.b16 %v530, %v528
    %v647 = vpack.c.b16 %v533, %v531
    %v648 = vpack.c.b16 %v534, %v532
    %v649 = vpack.c.b16 %v537, %v535
    %v650 = vpack.c.b16 %v538, %v536
    %v651 = vpack.c.b16 %v541, %v539
    %v652 = vpack.c.b16 %v542, %v540
    %v653 = vpack.c.b16 %v545, %v543
    %v654 = vpack.c.b16 %v546, %v544
    %v655 = vpack.c.b16 %v549, %v547
    %v656 = vpack.c.b16 %v550, %v548
    %v657 = vpack.c.b16 %v553, %v551
    %v658 = vpack.c.b16 %v554, %v552
    %v659 = vpack.c.b16 %v557, %v555
    %v660 = vpack.c.b16 %v558, %v556
    %v661 = vpack.c.b16 %v561, %v559
    %v662 = vpack.c.b16 %v562, %v560
    %v663 = vpack.c.b16 %v565, %v563
    %v664 = vpack.c.b16 %v566, %v564
    %vm763 = vcmask 130048
    %v765 = vsel %vm763, %v266, 0
    %767 = vmatpush.bf16.msra.mxu0 %v581
    %768 = vmatpush.bf16.msra.mxu0 %v579
    %769 = vmatpush.bf16.msra.mxu0 %v577
    %770 = vmatpush.bf16.msra.mxu0 %v575
    %771 = vmatpush.bf16.msra.mxu0 %v573
    %772 = vmatpush.bf16.msra.mxu0 %v571
    %773 = vmatpush.bf16.msra.mxu0 %v569
    %774 = vmatpush.bf16.msra.mxu0 %v567
    %775 = vmatmul.bf16.gmra.mxu0 %v260
    %v776 = vpop.f32.mrf.mxu0
    %v777 = vadd.f32 %v234, %v776
    %v778 = vpop.f32.mrf.mxu0
    %v779 = vadd.f32 %v234, %v778
    %780 = vdwg.mxu0
    %781 = vmatpush.bf16.msra.mxu0 %v597
    %782 = vmatpush.bf16.msra.mxu0 %v595
    %783 = vmatpush.bf16.msra.mxu0 %v593
    %784 = vmatpush.bf16.msra.mxu0 %v591
    %785 = vmatpush.bf16.msra.mxu0 %v589
    %786 = vmatpush.bf16.msra.mxu0 %v587
    %787 = vmatpush.bf16.msra.mxu0 %v585
    %788 = vmatpush.bf16.msra.mxu0 %v583
    %789 = vmatmul.bf16.gmra.mxu0 %v261
    %v790 = vpop.f32.mrf.mxu0
    %v791 = vadd.f32 %v777, %v790
    %v792 = vpop.f32.mrf.mxu0
    %v793 = vadd.f32 %v779, %v792
    %794 = vdwg.mxu0
    %795 = vmatpush.bf16.msra.mxu0 %v613
    %796 = vmatpush.bf16.msra.mxu0 %v611
    %797 = vmatpush.bf16.msra.mxu0 %v609
    %798 = vmatpush.bf16.msra.mxu0 %v607
    %799 = vmatpush.bf16.msra.mxu0 %v605
    %800 = vmatpush.bf16.msra.mxu0 %v603
    %801 = vmatpush.bf16.msra.mxu0 %v601
    %802 = vmatpush.bf16.msra.mxu0 %v599
    %803 = vmatmul.bf16.gmra.mxu0 %v262
    %v804 = vpop.f32.mrf.mxu0
    %v805 = vadd.f32 %v791, %v804
    %v806 = vpop.f32.mrf.mxu0
    %v807 = vadd.f32 %v793, %v806
    %808 = vdwg.mxu0
    %809 = vmatpush.bf16.msra.mxu0 %v629
    %810 = vmatpush.bf16.msra.mxu0 %v627
    %811 = vmatpush.bf16.msra.mxu0 %v625
    %812 = vmatpush.bf16.msra.mxu0 %v623
    %813 = vmatpush.bf16.msra.mxu0 %v621
    %814 = vmatpush.bf16.msra.mxu0 %v619
    %815 = vmatpush.bf16.msra.mxu0 %v617
    %816 = vmatpush.bf16.msra.mxu0 %v615
    %817 = vmatmul.bf16.gmra.mxu0 %v263
    %v818 = vpop.f32.mrf.mxu0
    %v819 = vadd.f32 %v805, %v818
    %v820 = vpop.f32.mrf.mxu0
    %v821 = vadd.f32 %v807, %v820
    %822 = vdwg.mxu0
    %823 = vmatpush.bf16.msra.mxu0 %v645
    %824 = vmatpush.bf16.msra.mxu0 %v643
    %825 = vmatpush.bf16.msra.mxu0 %v641
    %826 = vmatpush.bf16.msra.mxu0 %v639
    %827 = vmatpush.bf16.msra.mxu0 %v637
    %828 = vmatpush.bf16.msra.mxu0 %v635
    %829 = vmatpush.bf16.msra.mxu0 %v633
    %830 = vmatpush.bf16.msra.mxu0 %v631
    %831 = vmatmul.bf16.gmra.mxu0 %v264
    %v832 = vpop.f32.mrf.mxu0
    %v833 = vadd.f32 %v819, %v832
    %v834 = vpop.f32.mrf.mxu0
    %v835 = vadd.f32 %v821, %v834
    %836 = vdwg.mxu0
    %837 = vmatpush.bf16.msra.mxu0 %v661
    %838 = vmatpush.bf16.msra.mxu0 %v659
    %839 = vmatpush.bf16.msra.mxu0 %v657
    %840 = vmatpush.bf16.msra.mxu0 %v655
    %841 = vmatpush.bf16.msra.mxu0 %v653
    %842 = vmatpush.bf16.msra.mxu0 %v651
    %843 = vmatpush.bf16.msra.mxu0 %v649
    %844 = vmatpush.bf16.msra.mxu0 %v647
    %845 = vmatmul.bf16.gmra.mxu0 %v265
    %v846 = vpop.f32.mrf.mxu0
    %v847 = vadd.f32 %v833, %v846
    %v848 = vpop.f32.mrf.mxu0
    %v849 = vadd.f32 %v835, %v848
    %850 = vdwg.mxu0
    %851 = vmatpush.bf16.msra.mxu0 0
    %852 = vmatpush.bf16.msra.mxu0 0
    %853 = vmatpush.bf16.msra.mxu0 0
    %854 = vmatpush.bf16.msra.mxu0 0
    %855 = vmatpush.bf16.msra.mxu0 0
    %856 = vmatpush.bf16.msra.mxu0 0
    %857 = vmatpush.bf16.msra.mxu0 0
    %858 = vmatpush.bf16.msra.mxu0 %v663
    %859 = vmatmul.bf16.gmra.mxu0 %v765
    %v860 = vpop.f32.mrf.mxu0
    %v861 = vadd.f32 %v847, %v860
    %v862 = vpop.f32.mrf.mxu0
    %v863 = vadd.f32 %v849, %v862
    %864 = vdwg.mxu0
    %865 = vmatpush.bf16.msra.mxu0 %v582
    %866 = vmatpush.bf16.msra.mxu0 %v580
    %867 = vmatpush.bf16.msra.mxu0 %v578
    %868 = vmatpush.bf16.msra.mxu0 %v576
    %869 = vmatpush.bf16.msra.mxu0 %v574
    %870 = vmatpush.bf16.msra.mxu0 %v572
    %871 = vmatpush.bf16.msra.mxu0 %v570
    %872 = vmatpush.bf16.msra.mxu0 %v568
    %873 = vmatmul.bf16.gmra.mxu0 %v260
    %v874 = vpop.f32.mrf.mxu0
    %v875 = vadd.f32 %v235, %v874
    %v876 = vpop.f32.mrf.mxu0
    %v877 = vadd.f32 %v235, %v876
    %878 = vdwg.mxu0
    %879 = vmatpush.bf16.msra.mxu0 %v598
    %880 = vmatpush.bf16.msra.mxu0 %v596
    %881 = vmatpush.bf16.msra.mxu0 %v594
    %882 = vmatpush.bf16.msra.mxu0 %v592
    %883 = vmatpush.bf16.msra.mxu0 %v590
    %884 = vmatpush.bf16.msra.mxu0 %v588
    %885 = vmatpush.bf16.msra.mxu0 %v586
    %886 = vmatpush.bf16.msra.mxu0 %v584
    %887 = vmatmul.bf16.gmra.mxu0 %v261
    %v888 = vpop.f32.mrf.mxu0
    %v889 = vadd.f32 %v875, %v888
    %v890 = vpop.f32.mrf.mxu0
    %v891 = vadd.f32 %v877, %v890
    %892 = vdwg.mxu0
    %893 = vmatpush.bf16.msra.mxu0 %v614
    %894 = vmatpush.bf16.msra.mxu0 %v612
    %895 = vmatpush.bf16.msra.mxu0 %v610
    %896 = vmatpush.bf16.msra.mxu0 %v608
    %897 = vmatpush.bf16.msra.mxu0 %v606
    %898 = vmatpush.bf16.msra.mxu0 %v604
    %899 = vmatpush.bf16.msra.mxu0 %v602
    %900 = vmatpush.bf16.msra.mxu0 %v600
    %901 = vmatmul.bf16.gmra.mxu0 %v262
    %v902 = vpop.f32.mrf.mxu0
    %v903 = vadd.f32 %v889, %v902
    %v904 = vpop.f32.mrf.mxu0
    %v905 = vadd.f32 %v891, %v904
    %906 = vdwg.mxu0
    %907 = vmatpush.bf16.msra.mxu0 %v630
    %908 = vmatpush.bf16.msra.mxu0 %v628
    %909 = vmatpush.bf16.msra.mxu0 %v626
    %910 = vmatpush.bf16.msra.mxu0 %v624
    %911 = vmatpush.bf16.msra.mxu0 %v622
    %912 = vmatpush.bf16.msra.mxu0 %v620
    %913 = vmatpush.bf16.msra.mxu0 %v618
    %914 = vmatpush.bf16.msra.mxu0 %v616
    %915 = vmatmul.bf16.gmra.mxu0 %v263
    %v916 = vpop.f32.mrf.mxu0
    %v917 = vadd.f32 %v903, %v916
    %v918 = vpop.f32.mrf.mxu0
    %v919 = vadd.f32 %v905, %v918
    %920 = vdwg.mxu0
    %921 = vmatpush.bf16.msra.mxu0 %v646
    %922 = vmatpush.bf16.msra.mxu0 %v644
    %923 = vmatpush.bf16.msra.mxu0 %v642
    %924 = vmatpush.bf16.msra.mxu0 %v640
    %925 = vmatpush.bf16.msra.mxu0 %v638
    %926 = vmatpush.bf16.msra.mxu0 %v636
    %927 = vmatpush.bf16.msra.mxu0 %v634
    %928 = vmatpush.bf16.msra.mxu0 %v632
    %929 = vmatmul.bf16.gmra.mxu0 %v264
    %v930 = vpop.f32.mrf.mxu0
    %v931 = vadd.f32 %v917, %v930
    %v932 = vpop.f32.mrf.mxu0
    %v933 = vadd.f32 %v919, %v932
    %934 = vdwg.mxu0
    %935 = vmatpush.bf16.msra.mxu0 %v662
    %936 = vmatpush.bf16.msra.mxu0 %v660
    %937 = vmatpush.bf16.msra.mxu0 %v658
    %938 = vmatpush.bf16.msra.mxu0 %v656
    %939 = vmatpush.bf16.msra.mxu0 %v654
    %940 = vmatpush.bf16.msra.mxu0 %v652
    %941 = vmatpush.bf16.msra.mxu0 %v650
    %942 = vmatpush.bf16.msra.mxu0 %v648
    %943 = vmatmul.bf16.gmra.mxu0 %v265
    %v944 = vpop.f32.mrf.mxu0
    %v945 = vadd.f32 %v931, %v944
    %v946 = vpop.f32.mrf.mxu0
    %v947 = vadd.f32 %v933, %v946
    %948 = vdwg.mxu0
    %949 = vmatpush.bf16.msra.mxu0 0
    %950 = vmatpush.bf16.msra.mxu0 0
    %951 = vmatpush.bf16.msra.mxu0 0
    %952 = vmatpush.bf16.msra.mxu0 0
    %953 = vmatpush.bf16.msra.mxu0 0
    %954 = vmatpush.bf16.msra.mxu0 0
    %955 = vmatpush.bf16.msra.mxu0 0
    %956 = vmatpush.bf16.msra.mxu0 %v664
    %957 = vmatmul.bf16.gmra.mxu0 %v765
    %v958 = vpop.f32.mrf.mxu0
    %v959 = vadd.f32 %v945, %v958
    %v960 = vpop.f32.mrf.mxu0
    %v961 = vadd.f32 %v947, %v960
    %962 = vdwg.mxu0
    %v963 = vmul.f32 %v861, 0.5
    %v964 = vmul.f32 %v959, 0.5
    %v965 = vmul.f32 %v863, 0.5
    %v966 = vmul.f32 %v961, 0.5
    %v967 = vtanh.pop %v963
    %v968 = vtanh.pop %v964
    %v969 = vtanh.pop %v965
    %v970 = vtanh.pop %v966
    %v971 = vmul.f32 %v967, 0.5
    %v972 = vmul.f32 %v968, 0.5
    %v973 = vmul.f32 %v969, 0.5
    %v974 = vmul.f32 %v970, 0.5
    %v975 = vadd.f32 %v971, 0.5
    %v976 = vadd.f32 %v972, 0.5
    %v977 = vadd.f32 %v973, 0.5
    %v978 = vadd.f32 %v974, 0.5
    %v979 = vpack.c.bf16 %v977, %v975
    %v980 = vpack.c.bf16 %v978, %v976
    %v981 = vld [vmem:[#allocation8] sm:$0xf]
    %v982 = vld [vmem:[#allocation8 + $0x4] sm:$0xf]
    %v983 = vld [vmem:[#allocation8 + $0x8] sm:$0xf]
    %v984 = vld [vmem:[#allocation8 + $0xc] sm:$0xf]
    %v985 = vld [vmem:[#allocation8 + $0x10] sm:$0xf]
    %v986 = vld [vmem:[#allocation8 + $0x14] sm:$0xf]
    %v987 = vld [vmem:[#allocation8 + $0x18] sm:$0xf]
    %v988 = vld [vmem:[#allocation8 + $0x1c] sm:$0xf]
    %v989 = vld [vmem:[#allocation8 + $0x20] sm:$0xf]
    %v990 = vld [vmem:[#allocation8 + $0x24] sm:$0xf]
    %v991 = vld [vmem:[#allocation8 + $0x28] sm:$0xf]
    %v992 = vld [vmem:[#allocation8 + $0x2c] sm:$0xf]
    %v993 = vld [vmem:[#allocation8 + $0x30] sm:$0xf]
    %v994 = vld [vmem:[#allocation8 + $0x34] sm:$0xf]
    %v995 = vld [vmem:[#allocation8 + $0x38] sm:$0xf]
    %v996 = vld [vmem:[#allocation8 + $0x3c] sm:$0xf]
    %v997 = vld [vmem:[#allocation8 + $0x40] sm:$0xf]
    %v998 = vld [vmem:[#allocation8 + $0x44] sm:$0xf]
    %v999 = vld [vmem:[#allocation8 + $0x48] sm:$0xf]
    %v1000 = vld [vmem:[#allocation8 + $0x4c] sm:$0xf]
    %v1001 = vld [vmem:[#allocation8 + $0x50] sm:$0xf]
    %v1002 = vld [vmem:[#allocation8 + $0x54] sm:$0xf]
    %v1003 = vld [vmem:[#allocation8 + $0x58] sm:$0xf]
    %v1004 = vld [vmem:[#allocation8 + $0x5c] sm:$0xf]
    %v1005 = vld [vmem:[#allocation8 + $0x60] sm:$0xf]
    %v1006 = vld [vmem:[#allocation8 + $0x64] sm:$0xf]
    %v1007 = vld [vmem:[#allocation8 + $0x68] sm:$0xf]
    %v1008 = vld [vmem:[#allocation8 + $0x6c] sm:$0xf]
    %v1009 = vld [vmem:[#allocation8 + $0x70] sm:$0xf]
    %v1010 = vld [vmem:[#allocation8 + $0x74] sm:$0xf]
    %v1011 = vld [vmem:[#allocation8 + $0x78] sm:$0xf]
    %v1012 = vld [vmem:[#allocation8 + $0x7c] sm:$0xf]
    %v1013 = vld [vmem:[%s4] sm:$0x1]
    %v1015 = vperm.slane %v1013, 0
    %v1049 = vunpack.c.l.b16 %v981
    %v1050 = vunpack.c.l.b16 %v982
    %v1051 = vunpack.c.l.b16 %v983
    %v1052 = vunpack.c.l.b16 %v984
    %v1053 = vunpack.c.l.b16 %v985
    %v1054 = vunpack.c.l.b16 %v986
    %v1055 = vunpack.c.l.b16 %v987
    %v1056 = vunpack.c.l.b16 %v988
    %v1057 = vunpack.c.l.b16 %v989
    %v1058 = vunpack.c.l.b16 %v990
    %v1059 = vunpack.c.l.b16 %v991
    %v1060 = vunpack.c.l.b16 %v992
    %v1061 = vunpack.c.l.b16 %v993
    %v1062 = vunpack.c.l.b16 %v994
    %v1063 = vunpack.c.l.b16 %v995
    %v1064 = vunpack.c.l.b16 %v996
    %v1065 = vunpack.c.l.b16 %v997
    %v1066 = vunpack.c.l.b16 %v998
    %v1067 = vunpack.c.l.b16 %v999
    %v1068 = vunpack.c.l.b16 %v1000
    %v1069 = vunpack.c.l.b16 %v1001
    %v1070 = vunpack.c.l.b16 %v1002
    %v1071 = vunpack.c.l.b16 %v1003
    %v1072 = vunpack.c.l.b16 %v1004
    %v1073 = vunpack.c.l.b16 %v1005
    %v1074 = vunpack.c.l.b16 %v1006
    %v1075 = vunpack.c.l.b16 %v1007
    %v1076 = vunpack.c.l.b16 %v1008
    %v1077 = vunpack.c.l.b16 %v1009
    %v1078 = vunpack.c.l.b16 %v1010
    %v1079 = vunpack.c.l.b16 %v1011
    %v1080 = vunpack.c.l.b16 %v1012
    %v1081 = vpack.c.b16 %v1050, %v1049
    %v1082 = vpack.c.b16 %v1052, %v1051
    %v1083 = vpack.c.b16 %v1054, %v1053
    %v1084 = vpack.c.b16 %v1056, %v1055
    %v1085 = vpack.c.b16 %v1058, %v1057
    %v1086 = vpack.c.b16 %v1060, %v1059
    %v1087 = vpack.c.b16 %v1062, %v1061
    %v1088 = vpack.c.b16 %v1064, %v1063
    %v1089 = vpack.c.b16 %v1066, %v1065
    %v1090 = vpack.c.b16 %v1068, %v1067
    %v1091 = vpack.c.b16 %v1070, %v1069
    %v1092 = vpack.c.b16 %v1072, %v1071
    %v1093 = vpack.c.b16 %v1074, %v1073
    %v1094 = vpack.c.b16 %v1076, %v1075
    %v1095 = vpack.c.b16 %v1078, %v1077
    %v1096 = vpack.c.b16 %v1080, %v1079
    %1113 = vmatpush.bf16.msra.mxu0 %v1088
    %1114 = vmatpush.bf16.msra.mxu0 %v1087
    %1115 = vmatpush.bf16.msra.mxu0 %v1086
    %1116 = vmatpush.bf16.msra.mxu0 %v1085
    %1117 = vmatpush.bf16.msra.mxu0 %v1084
    %1118 = vmatpush.bf16.msra.mxu0 %v1083
    %1119 = vmatpush.bf16.msra.mxu0 %v1082
    %1120 = vmatpush.bf16.msra.mxu0 %v1081
    %1121 = vmatmul.bf16.gmra.mxu0 %v979
    %v1122 = vpop.f32.mrf.mxu0
    %v1123 = vadd.f32 %v1015, %v1122
    %v1124 = vpop.f32.mrf.mxu0
    %v1125 = vadd.f32 %v1015, %v1124
    %1126 = vdwg.mxu0
    %1127 = vmatpush.bf16.msra.mxu0 %v1096
    %1128 = vmatpush.bf16.msra.mxu0 %v1095
    %1129 = vmatpush.bf16.msra.mxu0 %v1094
    %1130 = vmatpush.bf16.msra.mxu0 %v1093
    %1131 = vmatpush.bf16.msra.mxu0 %v1092
    %1132 = vmatpush.bf16.msra.mxu0 %v1091
    %1133 = vmatpush.bf16.msra.mxu0 %v1090
    %1134 = vmatpush.bf16.msra.mxu0 %v1089
    %1135 = vmatmul.bf16.gmra.mxu0 %v980
    %v1136 = vpop.f32.mrf.mxu0
    %v1137 = vadd.f32 %v1123, %v1136
    %v1138 = vpop.f32.mrf.mxu0
    %v1139 = vadd.f32 %v1125, %v1138
    %1140 = vdwg.mxu0
    %v1141 = vmul.f32 %v1137, 0.5
    %v1142 = vmul.f32 %v1139, 0.5
    %v1143 = vtanh.pop %v1141
    %v1144 = vtanh.pop %v1142
    %v1145 = vmul.f32 %v1143, 0.5
    %v1146 = vmul.f32 %v1144, 0.5
    %v1147 = vadd.f32 %v1145, 0.5
    %v1148 = vadd.f32 %v1146, 0.5
    %v1149 = vpack.c.bf16 %v1148, %v1147
    %v1150 = vld [vmem:[#allocation10] sm:$0xf]
    %v1151 = vld [vmem:[#allocation10 + $0x4] sm:$0xf]
    %v1152 = vld [vmem:[#allocation10 + $0x8] sm:$0xf]
    %v1153 = vld [vmem:[#allocation10 + $0xc] sm:$0xf]
    %v1154 = vld [vmem:[#allocation10 + $0x10] sm:$0xf]
    %v1155 = vld [vmem:[#allocation10 + $0x14] sm:$0xf]
    %v1156 = vld [vmem:[#allocation10 + $0x18] sm:$0xf]
    %v1157 = vld [vmem:[#allocation10 + $0x1c] sm:$0xf]
    %v1158 = vld [vmem:[#allocation10 + $0x20] sm:$0xf]
    %v1159 = vld [vmem:[#allocation10 + $0x24] sm:$0xf]
    %v1160 = vld [vmem:[#allocation10 + $0x28] sm:$0xf]
    %v1161 = vld [vmem:[#allocation10 + $0x2c] sm:$0xf]
    %v1162 = vld [vmem:[#allocation10 + $0x30] sm:$0xf]
    %v1163 = vld [vmem:[#allocation10 + $0x34] sm:$0xf]
    %v1164 = vld [vmem:[#allocation10 + $0x38] sm:$0xf]
    %v1165 = vld [vmem:[#allocation10 + $0x3c] sm:$0xf]
    %v1166 = vld [vmem:[%s6] sm:$0x1]
    %v1168 = vperm.slane %v1166, 0
    %v1186 = vunpack.c.l.b16 %v1150
    %v1187 = vunpack.c.l.b16 %v1151
    %v1188 = vunpack.c.l.b16 %v1152
    %v1189 = vunpack.c.l.b16 %v1153
    %v1190 = vunpack.c.l.b16 %v1154
    %v1191 = vunpack.c.l.b16 %v1155
    %v1192 = vunpack.c.l.b16 %v1156
    %v1193 = vunpack.c.l.b16 %v1157
    %v1194 = vunpack.c.l.b16 %v1158
    %v1195 = vunpack.c.l.b16 %v1159
    %v1196 = vunpack.c.l.b16 %v1160
    %v1197 = vunpack.c.l.b16 %v1161
    %v1198 = vunpack.c.l.b16 %v1162
    %v1199 = vunpack.c.l.b16 %v1163
    %v1200 = vunpack.c.l.b16 %v1164
    %v1201 = vunpack.c.l.b16 %v1165
    %v1202 = vpack.c.b16 %v1187, %v1186
    %v1203 = vpack.c.b16 %v1189, %v1188
    %v1204 = vpack.c.b16 %v1191, %v1190
    %v1205 = vpack.c.b16 %v1193, %v1192
    %v1206 = vpack.c.b16 %v1195, %v1194
    %v1207 = vpack.c.b16 %v1197, %v1196
    %v1208 = vpack.c.b16 %v1199, %v1198
    %v1209 = vpack.c.b16 %v1201, %v1200
    %1218 = vmatpush.bf16.msra.mxu0 %v1209
    %1219 = vmatpush.bf16.msra.mxu0 %v1208
    %1220 = vmatpush.bf16.msra.mxu0 %v1207
    %1221 = vmatpush.bf16.msra.mxu0 %v1206
    %1222 = vmatpush.bf16.msra.mxu0 %v1205
    %1223 = vmatpush.bf16.msra.mxu0 %v1204
    %1224 = vmatpush.bf16.msra.mxu0 %v1203
    %1225 = vmatpush.bf16.msra.mxu0 %v1202
    %1226 = vmatmul.bf16.gmra.mxu0 %v1149
    %v1227 = vpop.f32.mrf.mxu0
    %v1228 = vadd.f32 %v1168, %v1227
    %v1229 = vpop.f32.mrf.mxu0
    %v1230 = vadd.f32 %v1168, %v1229
    %1231 = vdwg.mxu0
    %v1232 = vmul.f32 %v1228, 0.5
    %v1233 = vmul.f32 %v1230, 0.5
    %v1234 = vtanh.pop %v1232
    %v1235 = vtanh.pop %v1233
    %v1236 = vmul.f32 %v1234, 0.5
    %v1237 = vmul.f32 %v1235, 0.5
    %v1238 = vadd.f32 %v1236, 0.5
    %v1239 = vadd.f32 %v1237, 0.5
    %v1240 = vpack.c.bf16 %v1239, %v1238
    %v1241 = vld [vmem:[#allocation11] sm:$0xf]
    %v1242 = vld [vmem:[#allocation11 + $0x4] sm:$0xf]
    %v1243 = vld [vmem:[#allocation11 + $0x8] sm:$0xf]
    %v1244 = vld [vmem:[#allocation11 + $0xc] sm:$0xf]
    %v1245 = vld [vmem:[#allocation11 + $0x10] sm:$0xf]
    %v1246 = vld [vmem:[#allocation11 + $0x14] sm:$0xf]
    %v1247 = vld [vmem:[#allocation11 + $0x18] sm:$0xf]
    %v1248 = vld [vmem:[#allocation11 + $0x1c] sm:$0xf]
    %v1249 = vld [vmem:[#allocation11 + $0x20] sm:$0xf]
    %v1250 = vld [vmem:[#allocation11 + $0x24] sm:$0xf]
    %v1251 = vld [vmem:[#allocation11 + $0x28] sm:$0xf]
    %v1252 = vld [vmem:[#allocation11 + $0x2c] sm:$0xf]
    %v1253 = vld [vmem:[#allocation11 + $0x30] sm:$0xf]
    %v1254 = vld [vmem:[#allocation11 + $0x34] sm:$0xf]
    %v1255 = vld [vmem:[#allocation11 + $0x38] sm:$0xf]
    %v1256 = vld [vmem:[#allocation11 + $0x3c] sm:$0xf]
    %v1257 = vld [vmem:[%s8] sm:$0x1]
    %v1259 = vperm.slane %v1257, 0
    %v1277 = vunpack.c.l.b16 %v1241
    %v1278 = vunpack.c.l.b16 %v1242
    %v1279 = vunpack.c.l.b16 %v1243
    %v1280 = vunpack.c.l.b16 %v1244
    %v1281 = vunpack.c.l.b16 %v1245
    %v1282 = vunpack.c.l.b16 %v1246
    %v1283 = vunpack.c.l.b16 %v1247
    %v1284 = vunpack.c.l.b16 %v1248
    %v1285 = vunpack.c.l.b16 %v1249
    %v1286 = vunpack.c.l.b16 %v1250
    %v1287 = vunpack.c.l.b16 %v1251
    %v1288 = vunpack.c.l.b16 %v1252
    %v1289 = vunpack.c.l.b16 %v1253
    %v1290 = vunpack.c.l.b16 %v1254
    %v1291 = vunpack.c.l.b16 %v1255
    %v1292 = vunpack.c.l.b16 %v1256
    %v1293 = vpack.c.b16 %v1278, %v1277
    %v1294 = vpack.c.b16 %v1280, %v1279
    %v1295 = vpack.c.b16 %v1282, %v1281
    %v1296 = vpack.c.b16 %v1284, %v1283
    %v1297 = vpack.c.b16 %v1286, %v1285
    %v1298 = vpack.c.b16 %v1288, %v1287
    %v1299 = vpack.c.b16 %v1290, %v1289
    %v1300 = vpack.c.b16 %v1292, %v1291
    %1309 = vmatpush.bf16.msra.mxu0 %v1300
    %1310 = vmatpush.bf16.msra.mxu0 %v1299
    %1311 = vmatpush.bf16.msra.mxu0 %v1298
    %1312 = vmatpush.bf16.msra.mxu0 %v1297
    %1313 = vmatpush.bf16.msra.mxu0 %v1296
    %1314 = vmatpush.bf16.msra.mxu0 %v1295
    %1315 = vmatpush.bf16.msra.mxu0 %v1294
    %1316 = vmatpush.bf16.msra.mxu0 %v1293
    %1317 = vmatmul.bf16.gmra.mxu0 %v1240
    %v1318 = vpop.f32.mrf.mxu0
    %v1319 = vadd.f32 %v1259, %v1318
    %v1320 = vpop.f32.mrf.mxu0
    %v1321 = vadd.f32 %v1259, %v1320
    %1322 = vdwg.mxu0
    %v1323 = vmul.f32 %v1319, 0.5
    %v1324 = vmul.f32 %v1321, 0.5
    %v1325 = vtanh.pop %v1323
    %v1326 = vtanh.pop %v1324
    %v1327 = vmul.f32 %v1325, 0.5
    %v1328 = vmul.f32 %v1326, 0.5
    %v1329 = vadd.f32 %v1327, 0.5
    %v1330 = vadd.f32 %v1328, 0.5
    %v1331 = vpack.c.bf16 %v1329, %v1329
    %v1332 = vpack.c.bf16 %v1330, %v1330
    %1333 = vst [vmem:[#allocation13] sm:$0xf] %v1331
    %1334 = vst [vmem:[#allocation13 + $0x4] sm:$0xf] %v1332
    // Predicated region
    $region62: #{tpu_custom_call.1} parent=1 // pred_check
      _
    $region63: #{tpu_custom_call.1} parent=1 // pred_check_branch
      %1336 = sbr.rel (0) target = $region65
    $region64: #{tpu_custom_call.1} parent=1 // pred_region
      %1338 = vsyncadd [#allocation4], 0
      %s1339 = sshll.u32 [#allocation13], 4
      %s1340 = int_to_ptr.vmem [resolvable:$true] %s1339
      %s1341 = sshll.u32 %s9, 4
      %s1342 = int_to_ptr.hbm [resolvable:$true] %s1341
      %1347 = dma.vmem_to_hbm [thread:$0]  %s1340, 128, %s1342, [#allocation4], 64, 64, 4
    $region65: #{tpu_custom_call.1} parent=1 // pred_fallthru
      _
    // Predicated region
    $region66: #{tpu_custom_call.1} parent=1 // pred_check
      _
    $region67: #{tpu_custom_call.1} parent=1 // pred_check_branch
      %1349 = sbr.rel (0) target = $region69
    $region68: #{tpu_custom_call.1} parent=1 // pred_region
      %1351 = dma.done [#allocation4], 128
    $region69: #{tpu_custom_call.1} parent=1 // pred_fallthru
      _
    %1352 = vsyncpa [#allocation3], 1
    %1353 = vsyncpa [#allocation6], 1
    %1354 = vsyncpa [#allocation9], 1
    %1355 = vsyncpa [#allocation12], 1
    %1356 = vsyncpa [#allocation4], 1

</llo_original>
